<compile_context>
chip_gen: v7x
topology: tpu7x:2x2x1
jax: 0.10.0
libtpu: 0.0.40
codegen_flags: <defaults>
</compile_context>

<pallas_src>
import math

import jax
import jax.numpy as jnp
from jax import lax
from jax.experimental import pallas as pl
from jax.experimental.pallas import tpu as pltpu

# --- hyperparameters (hp.*) chosen for consistency ---
TOKEN_NUM = 10                     # hp.token_num
TOKEN_EMB = 256                    # hp.token_emb_size
NUM_HEADS = 2                      # hp.num_heads
D_K = TOKEN_EMB // NUM_HEADS       # 128 : feature dim of style tokens (= kdim = vdim)
EMBED_DIM = 128                    # nn.MultiheadAttention embed_dim
HEAD_DIM = EMBED_DIM // NUM_HEADS  # 64
TWO_T = NUM_HEADS * TOKEN_NUM      # 20 : both heads' scores packed along lanes


def _round_up(x, m):
    return ((x + m - 1) // m) * m


def gqdl_attention_kernel(x_ref, ws_ref, bs_ref, wc_ref, bo_ref, out_ref, attn_ref):
    """One batch tile of the folded GST attention.

    x_ref  : [TILE_N, 128] bf16
    ws_ref : [128, 2T]     bf16   (scale + query bias folded in via b_s)
    bs_ref : [1, 2T]       f32
    wc_ref : [2T, 128]     bf16   (value / output projection folded)
    bo_ref : [1, 128]      f32
    """
    # Both heads' scaled scores in one MXU matmul: [TILE_N, 2T] (f32 accumulate).
    s = jnp.dot(x_ref[...], ws_ref[...],
                preferred_element_type=jnp.float32) + bs_ref[...]

    # Per-head softmax over the two T-wide lane segments, done with segment
    # masks (no unaligned lane slicing of q/k/v, no concat).
    col = lax.broadcasted_iota(jnp.int32, s.shape, 1)
    h0 = col < TOKEN_NUM
    neg = jnp.float32(-jnp.inf)
    m0 = jnp.max(jnp.where(h0, s, neg), axis=-1, keepdims=True)
    m1 = jnp.max(jnp.where(h0, neg, s), axis=-1, keepdims=True)
    e = jnp.exp(s - jnp.where(h0, m0, m1))
    l0 = jnp.sum(jnp.where(h0, e, 0.0), axis=-1, keepdims=True)
    l1 = jnp.sum(jnp.where(h0, 0.0, e), axis=-1, keepdims=True)
    # EUP reciprocal instead of a full-width VPU divide.
    r = jnp.where(h0, pl.reciprocal(l0, approx=True), pl.reciprocal(l1, approx=True))
    p = e * r                                               # [TILE_N, 2T] f32

    # Output projection of both heads' contexts in one matmul.
    out = jnp.dot(p.astype(wc_ref.dtype), wc_ref[...],
                  preferred_element_type=jnp.float32) + bo_ref[...]
    out_ref[...] = out.astype(out_ref.dtype)

    # nn.MultiheadAttention returns head-averaged attention weights by default.
    # (10-lane store is masked; kept narrow on purpose to avoid padding the
    #  HBM writeback from 40 to 512 bytes/row.)
    attn_ref[...] = (0.5 * (p[:, :TOKEN_NUM] + p[:, TOKEN_NUM:])).astype(attn_ref.dtype)


def init_params(key):
    ks = jax.random.split(key, 6)
    # STL.embed ~ Normal(0, 0.5), shape [token_num, token_emb_size // num_heads]
    embed = 0.5 * jax.random.normal(ks[0], (TOKEN_NUM, D_K), jnp.float32)
    # MultiheadAttention projection weights (stored transposed: [in, out])
    wq_t = 0.05 * jax.random.normal(ks[1], (EMBED_DIM, EMBED_DIM), jnp.float32)
    wk_t = 0.05 * jax.random.normal(ks[2], (D_K, EMBED_DIM), jnp.float32)
    wv_t = 0.05 * jax.random.normal(ks[3], (D_K, EMBED_DIM), jnp.float32)
    wo_t = 0.05 * jax.random.normal(ks[4], (EMBED_DIM, EMBED_DIM), jnp.float32)
    bq = jnp.zeros((1, EMBED_DIM), jnp.float32)
    bk = jnp.zeros((1, EMBED_DIM), jnp.float32)
    bv = jnp.zeros((1, EMBED_DIM), jnp.float32)
    bo = 0.01 * jax.random.normal(ks[5], (1, EMBED_DIM), jnp.float32)
    return dict(embed=embed, wq_t=wq_t, bq=bq, wk_t=wk_t, bk=bk,
                wv_t=wv_t, bv=bv, wo_t=wo_t, bo=bo)


def fold_constants(params):
    """Pre-fold everything that does not depend on `inputs` (done once).

    keys = values = tanh(embed); k = keys@Wk+bk; v = keys@Wv+bv are constant,
    so per head h:
        scores_h = x @ (Wq_h @ k_h.T * scale) + (bq_h @ k_h.T * scale)
        out      = sum_h p_h @ (v_h @ Wo_h) + bo
    """
    keys = jnp.tanh(params["embed"])                             # [T, 128]
    k = keys @ params["wk_t"] + params["bk"]                     # [T, E]
    v = keys @ params["wv_t"] + params["bv"]                     # [T, E]
    scale = 1.0 / math.sqrt(HEAD_DIM)

    ws_cols, bs_cols, wc_rows = [], [], []
    for h in range(NUM_HEADS):
        lo, hi = h * HEAD_DIM, (h + 1) * HEAD_DIM
        kh = k[:, lo:hi]                                         # [T, hd]
        vh = v[:, lo:hi]                                         # [T, hd]
        ws_cols.append((params["wq_t"][:, lo:hi] @ kh.T) * scale)   # [E, T]
        bs_cols.append((params["bq"][:, lo:hi] @ kh.T) * scale)     # [1, T]
        wc_rows.append(vh @ params["wo_t"][lo:hi, :])               # [T, E]

    w_s = jnp.concatenate(ws_cols, axis=1)                       # [E, 2T]
    b_s = jnp.concatenate(bs_cols, axis=1)                       # [1, 2T]
    w_c = jnp.concatenate(wc_rows, axis=0)                       # [2T, E]
    return dict(w_s=w_s.astype(jnp.bfloat16),                    # MXU operands in bf16
                b_s=b_s.astype(jnp.float32),
                w_c=w_c.astype(jnp.bfloat16),
                bo=params["bo"].astype(jnp.float32))


def gqdl_forward(inputs, folded, tile_n=512):
    """inputs: [N, token_emb_size // 2] = [N, 128]
       -> (style_embed [N, 1, 128], attn_w [N, 1, T])"""
    N = inputs.shape[0]
    tn = min(tile_n, _round_up(N, 8))          # batch tile (multiple of 8 sublanes)
    n_pad = _round_up(N, tn)

    x = inputs.astype(jnp.bfloat16)            # bf16 activations for the MXU
    if n_pad != N:
        x = jnp.pad(x, ((0, n_pad - N), (0, 0)))

    grid = (n_pad // tn,)
    flops = 2 * n_pad * EMBED_DIM * TWO_T * 2                 # two matmuls per row
    transcendentals = n_pad * (TWO_T + NUM_HEADS)             # exp + reciprocals
    bytes_accessed = (n_pad * (EMBED_DIM * 2 + EMBED_DIM * 4 + TOKEN_NUM * 4)
                      + 2 * EMBED_DIM * TWO_T * 2 + (TWO_T + EMBED_DIM) * 4)

    out, attn = pl.pallas_call(
        gqdl_attention_kernel,
        out_shape=(jax.ShapeDtypeStruct((n_pad, EMBED_DIM), jnp.float32),
                   jax.ShapeDtypeStruct((n_pad, TOKEN_NUM), jnp.float32)),
        grid=grid,
        in_specs=[
            pl.BlockSpec((tn, EMBED_DIM), lambda i: (i, 0)),       # x tile (pipelined)
            pl.BlockSpec((EMBED_DIM, TWO_T), lambda i: (0, 0)),    # W_s (VMEM-resident)
            pl.BlockSpec((1, TWO_T), lambda i: (0, 0)),            # b_s
            pl.BlockSpec((TWO_T, EMBED_DIM), lambda i: (0, 0)),    # W_c
            pl.BlockSpec((1, EMBED_DIM), lambda i: (0, 0)),        # bo
        ],
        out_specs=(pl.BlockSpec((tn, EMBED_DIM), lambda i: (i, 0)),
                   pl.BlockSpec((tn, TOKEN_NUM), lambda i: (i, 0))),
        compiler_params=pltpu.CompilerParams(
            dimension_semantics=("parallel",)),                    # megacore over batch
        cost_estimate=pl.CostEstimate(flops=flops,
                                      transcendentals=transcendentals,
                                      bytes_accessed=bytes_accessed),
    )(x, folded["w_s"], folded["b_s"], folded["w_c"], folded["bo"])

    out = out[:N]
    attn = attn[:N]
    # match nn.MultiheadAttention output shapes for a length-1 query sequence
    return out.reshape(N, 1, EMBED_DIM), attn.reshape(N, 1, TOKEN_NUM)


if __name__ == "__main__":
    key = jax.random.PRNGKey(0)
    pkey, xkey = jax.random.split(key)
    params = init_params(pkey)
    folded = fold_constants(params)            # constant-folded once, outside jit

    N = 256  # batch (small demo; tile_n=128 -> 2 pipelined grid steps)
    inputs = jax.random.normal(xkey, (N, TOKEN_EMB // 2), jnp.float32)  # [256, 128]

    fwd = jax.jit(gqdl_forward, static_argnames=("tile_n",))
    style_embed, attn_weights = fwd(inputs, folded, tile_n=128)
    jax.block_until_ready((style_embed, attn_weights))

    assert style_embed.shape == (N, 1, EMBED_DIM)
    assert attn_weights.shape == (N, 1, TOKEN_NUM)
    # attention weights must be a distribution over the tokens; tolerance is
    # loose because the softmax denominator uses the EUP approximate reciprocal
    assert jnp.allclose(jnp.sum(attn_weights, axis=-1), 1.0, atol=1e-2)
    assert bool(jnp.all(attn_weights >= 0.0))
    print("KERNEL_OK")
</pallas_src>

<mosaic_0001>
module attributes {stable_mosaic.version = 11 : i64} {
  func.func @gqdl_attention_kernel(%arg0: i32, %arg1: memref<128x128xbf16, #tpu.memory_space<vmem>>, %arg2: memref<128x20xbf16, #tpu.memory_space<vmem>>, %arg3: memref<1x20xf32, #tpu.memory_space<vmem>>, %arg4: memref<20x128xbf16, #tpu.memory_space<vmem>>, %arg5: memref<1x128xf32, #tpu.memory_space<vmem>>, %arg6: memref<128x128xf32, #tpu.memory_space<vmem>>, %arg7: memref<128x10xf32, #tpu.memory_space<vmem>>) attributes {dimension_semantics = [#tpu.dimension_semantics<parallel>], iteration_bounds = array<i64: 2>, scalar_prefetch = 0 : i64, scratch_operands = 0 : i64, tpu.core_type = #tpu.core_type<tc>, window_params = [{transform_indices = @transform_0, window_bounds = array<i64: 128, 128>}, {pipeline_mode = #tpu.pipeline_mode<synchronous>, transform_indices = @transform_1, window_bounds = array<i64: 128, 20>}, {pipeline_mode = #tpu.pipeline_mode<synchronous>, transform_indices = @transform_2, window_bounds = array<i64: 1, 20>}, {pipeline_mode = #tpu.pipeline_mode<synchronous>, transform_indices = @transform_3, window_bounds = array<i64: 20, 128>}, {pipeline_mode = #tpu.pipeline_mode<synchronous>, transform_indices = @transform_4, window_bounds = array<i64: 1, 128>}, {transform_indices = @transform_5, window_bounds = array<i64: 128, 128>}, {transform_indices = @transform_6, window_bounds = array<i64: 128, 10>}]} {
    %c0 = arith.constant 0 : index
    %c0_0 = arith.constant 0 : index
    %0 = vector.load %arg1[%c0, %c0_0] : memref<128x128xbf16, #tpu.memory_space<vmem>>, vector<128x128xbf16>
    %c0_1 = arith.constant 0 : index
    %c0_2 = arith.constant 0 : index
    %1 = vector.load %arg2[%c0_1, %c0_2] : memref<128x20xbf16, #tpu.memory_space<vmem>>, vector<128x20xbf16>
    %cst = arith.constant dense<0.000000e+00> : vector<128x20xf32>
    %2 = tpu.matmul %0, %1, %cst {dimension_numbers = #tpu.dot_dimension_numbers<[1], [0], [0], [1], [0, 0, 1, 1], [], []>} : vector<128x128xbf16>, vector<128x20xbf16>, vector<128x20xf32> -> vector<128x20xf32>
    %c0_3 = arith.constant 0 : index
    %c0_4 = arith.constant 0 : index
    %3 = vector.load %arg3[%c0_3, %c0_4] : memref<1x20xf32, #tpu.memory_space<vmem>>, vector<1x20xf32>
    %4 = vector.broadcast %3 : vector<1x20xf32> to vector<128x20xf32>
    %5 = arith.addf %2, %4 : vector<128x20xf32>
    %6 = tpu.iota {dimensions = array<i32: 1>} : vector<128x20xi32>
    %c10_i32 = arith.constant 10 : i32
    %7 = vector.broadcast %c10_i32 : i32 to vector<128x20xi32>
    %8 = arith.cmpi slt, %6, %7 : vector<128x20xi32>
    %cst_5 = arith.constant 0xFF800000 : f32
    %9 = vector.broadcast %cst_5 : f32 to vector<128x20xf32>
    %10 = arith.select %8, %5, %9 : vector<128x20xi1>, vector<128x20xf32>
    %cst_6 = arith.constant dense<0xFF800000> : vector<128xf32>
    %11 = vector.multi_reduction <maximumf>, %10, %cst_6 [1] : vector<128x20xf32> to vector<128xf32>
    %12 = vector.shape_cast %11 : vector<128xf32> to vector<128x1xf32>
    %cst_7 = arith.constant 0xFF800000 : f32
    %13 = vector.broadcast %cst_7 : f32 to vector<128x20xf32>
    %14 = arith.select %8, %13, %5 : vector<128x20xi1>, vector<128x20xf32>
    %cst_8 = arith.constant dense<0xFF800000> : vector<128xf32>
    %15 = vector.multi_reduction <maximumf>, %14, %cst_8 [1] : vector<128x20xf32> to vector<128xf32>
    %16 = vector.shape_cast %15 : vector<128xf32> to vector<128x1xf32>
    %17 = vector.shape_cast %12 : vector<128x1xf32> to vector<128x1xf32>
    %18 = vector.broadcast %17 : vector<128x1xf32> to vector<128x20xf32>
    %19 = vector.shape_cast %16 : vector<128x1xf32> to vector<128x1xf32>
    %20 = vector.broadcast %19 : vector<128x1xf32> to vector<128x20xf32>
    %21 = arith.select %8, %18, %20 : vector<128x20xi1>, vector<128x20xf32>
    %22 = arith.subf %5, %21 : vector<128x20xf32>
    %23 = math.exp %22 : vector<128x20xf32>
    %cst_9 = arith.constant 0.000000e+00 : f32
    %24 = vector.broadcast %cst_9 : f32 to vector<128x20xf32>
    %25 = arith.select %8, %23, %24 : vector<128x20xi1>, vector<128x20xf32>
    %cst_10 = arith.constant dense<0.000000e+00> : vector<128xf32>
    %26 = vector.multi_reduction <add>, %25, %cst_10 [1] : vector<128x20xf32> to vector<128xf32>
    %27 = vector.shape_cast %26 : vector<128xf32> to vector<128x1xf32>
    %cst_11 = arith.constant 0.000000e+00 : f32
    %28 = vector.broadcast %cst_11 : f32 to vector<128x20xf32>
    %29 = arith.select %8, %28, %23 : vector<128x20xi1>, vector<128x20xf32>
    %cst_12 = arith.constant dense<0.000000e+00> : vector<128xf32>
    %30 = vector.multi_reduction <add>, %29, %cst_12 [1] : vector<128x20xf32> to vector<128xf32>
    %31 = vector.shape_cast %30 : vector<128xf32> to vector<128x1xf32>
    %32 = tpu.reciprocal %27 {approx = true} : vector<128x1xf32> -> vector<128x1xf32>
    %33 = tpu.reciprocal %31 {approx = true} : vector<128x1xf32> -> vector<128x1xf32>
    %34 = vector.shape_cast %32 : vector<128x1xf32> to vector<128x1xf32>
    %35 = vector.broadcast %34 : vector<128x1xf32> to vector<128x20xf32>
    %36 = vector.shape_cast %33 : vector<128x1xf32> to vector<128x1xf32>
    %37 = vector.broadcast %36 : vector<128x1xf32> to vector<128x20xf32>
    %38 = arith.select %8, %35, %37 : vector<128x20xi1>, vector<128x20xf32>
    %39 = arith.mulf %23, %38 : vector<128x20xf32>
    %40 = arith.truncf %39 : vector<128x20xf32> to vector<128x20xbf16>
    %c0_13 = arith.constant 0 : index
    %c0_14 = arith.constant 0 : index
    %41 = vector.load %arg4[%c0_13, %c0_14] : memref<20x128xbf16, #tpu.memory_space<vmem>>, vector<20x128xbf16>
    %cst_15 = arith.constant dense<0.000000e+00> : vector<128x128xf32>
    %42 = tpu.matmul %40, %41, %cst_15 {dimension_numbers = #tpu.dot_dimension_numbers<[1], [0], [0], [1], [0, 0, 1, 1], [], []>} : vector<128x20xbf16>, vector<20x128xbf16>, vector<128x128xf32> -> vector<128x128xf32>
    %c0_16 = arith.constant 0 : index
    %c0_17 = arith.constant 0 : index
    %43 = vector.load %arg5[%c0_16, %c0_17] : memref<1x128xf32, #tpu.memory_space<vmem>>, vector<1x128xf32>
    %44 = vector.broadcast %43 : vector<1x128xf32> to vector<128x128xf32>
    %45 = arith.addf %42, %44 : vector<128x128xf32>
    %c0_18 = arith.constant 0 : index
    %c0_19 = arith.constant 0 : index
    %46 = vector.load %arg6[%c0_18, %c0_19] : memref<128x128xf32, #tpu.memory_space<vmem>>, vector<128x128xf32>
    tpu.vector_store %arg6[%c0_18, %c0_19], %45 {strides = array<i32>} : memref<128x128xf32, #tpu.memory_space<vmem>>, vector<128x128xf32>,
    %47 = vector.extract_strided_slice %39 {offsets = [0, 0], sizes = [128, 10], strides = [1, 1]} : vector<128x20xf32> to vector<128x10xf32>
    %48 = vector.extract_strided_slice %39 {offsets = [0, 10], sizes = [128, 10], strides = [1, 1]} : vector<128x20xf32> to vector<128x10xf32>
    %49 = arith.addf %47, %48 : vector<128x10xf32>
    %cst_20 = arith.constant 5.000000e-01 : f32
    %50 = vector.broadcast %cst_20 : f32 to vector<128x10xf32>
    %51 = arith.mulf %50, %49 : vector<128x10xf32>
    %c0_21 = arith.constant 0 : index
    %c0_22 = arith.constant 0 : index
    %52 = vector.load %arg7[%c0_21, %c0_22] : memref<128x10xf32, #tpu.memory_space<vmem>>, vector<128x10xf32>
    tpu.vector_store %arg7[%c0_21, %c0_22], %51 {strides = array<i32>} : memref<128x10xf32, #tpu.memory_space<vmem>>, vector<128x10xf32>,
    return
  }
  func.func @transform_0(%arg0: i32) -> (i32, i32) {
    %c0_i32 = arith.constant 0 : i32
    %c0_i32_0 = arith.constant 0 : i32
    return %arg0, %c0_i32 : i32, i32
  }
  func.func @transform_1(%arg0: i32) -> (i32, i32) {
    %c0_i32 = arith.constant 0 : i32
    %c0_i32_0 = arith.constant 0 : i32
    %c0_i32_1 = arith.constant 0 : i32
    return %c0_i32, %c0_i32_0 : i32, i32
  }
  func.func @transform_2(%arg0: i32) -> (i32, i32) {
    %c0_i32 = arith.constant 0 : i32
    %c0_i32_0 = arith.constant 0 : i32
    %c0_i32_1 = arith.constant 0 : i32
    return %c0_i32, %c0_i32_0 : i32, i32
  }
  func.func @transform_3(%arg0: i32) -> (i32, i32) {
    %c0_i32 = arith.constant 0 : i32
    %c0_i32_0 = arith.constant 0 : i32
    %c0_i32_1 = arith.constant 0 : i32
    return %c0_i32, %c0_i32_0 : i32, i32
  }
  func.func @transform_4(%arg0: i32) -> (i32, i32) {
    %c0_i32 = arith.constant 0 : i32
    %c0_i32_0 = arith.constant 0 : i32
    %c0_i32_1 = arith.constant 0 : i32
    return %c0_i32, %c0_i32_0 : i32, i32
  }
  func.func @transform_5(%arg0: i32) -> (i32, i32) {
    %c0_i32 = arith.constant 0 : i32
    %c0_i32_0 = arith.constant 0 : i32
    return %arg0, %c0_i32 : i32, i32
  }
  func.func @transform_6(%arg0: i32) -> (i32, i32) {
    %c0_i32 = arith.constant 0 : i32
    %c0_i32_0 = arith.constant 0 : i32
    return %arg0, %c0_i32 : i32, i32
  }
}

</mosaic_0001>

<llo_original>
// kernel: gqdl_forward.1
$region0: #{gqdl_forward.1}
  #allocation0 [shape = 'u32[]', space=smem, size = 0x4, offset = 0x4, fixed_abs, tag = 'smem constant byte address 0x4 - core index']
  #allocation1 [shape = 'u32[144,128]{1,0:T(1,128)}', space=vmem, size = 0x12000, scoped, tag = 'internal scratch']
  %s0 = inlined_call_operand.vmem [shape: bf16[256,128], index: 0, kind: input, shape index: {}]
  %s1 = inlined_call_operand.vmem [shape: bf16[128,20], index: 1, kind: input, shape index: {}]
  %s2 = inlined_call_operand.vmem [shape: f32[1,20], index: 2, kind: input, shape index: {}]
  %s3 = inlined_call_operand.vmem [shape: bf16[20,128], index: 3, kind: input, shape index: {}]
  %s4 = inlined_call_operand.vmem [shape: f32[1,128], index: 4, kind: input, shape index: {}]
  %s5 = inlined_call_operand.hbm [shape: f32[256,128], index: 5, kind: output, shape index: {0}]
  %s6 = inlined_call_operand.vmem [shape: f32[256,10], index: 6, kind: output, shape index: {1}]
  %7 = xla_tuple %s5, %s6
  %s8 = sld [smem:[#allocation0]]
  $region61: #{gqdl_forward.1} parent=0
    _
  %s10 = ssub.s32 1, %s8
  %s11 = scalar_select 0, %s10, %s8
  $region1: #{gqdl_forward.1} parent=0
    #allocation2 [shape = 'u8[131072]{0}', space=vmem, size = 0x20000, scoped, tag = 'output window, operand 0']
    #allocation3 [shape = 's32[2]{0}', space=sflag, size = 0x8, scoped, tag = 'scoped memory for gqdl_forward.1']
    %12 = vsyncpa [#allocation3], 0
    %s13 = scalar_lea.sflag [#allocation3], 1
    %14 = vsyncpa %s13, 0
    loop: start=0, step=1, limit=4
    $region2: #{gqdl_forward.1} parent=1 // loop_pre_header
      _
    $region3: #{gqdl_forward.1} parent=1 // loop_header
      %s16 = sphi 0, %s20
      %p17 = scmp.ge.s32.totalorder %s16, 4
      %s26 = sphi 0, %s28
      %s29 = sphi 0, %s26
      %s30 = sphi 0, %s29
      %s46 = sphi 0, %s30
      %s50 = sphi 0, %s50
      %s52 = sphi 0, %s50
      %s53 = sphi 0, %s52
      %s67 = sphi 0, %s53
      %s71 = sphi 0, %s71
      %s73 = sphi 0, %s71
      %s74 = sphi 0, %s73
      %s88 = sphi 0, %s74
      %s92 = sphi 0, %s92
      %s94 = sphi 0, %s92
      %s95 = sphi 0, %s94
      %s109 = sphi 0, %s95
      %s113 = sphi 0, %s113
      %s115 = sphi 0, %s113
      %s116 = sphi 0, %s115
      %s130 = sphi 0, %s116
      %s136 = sphi 0, %s138
      %s139 = sphi 0, %s136
      %s140 = sphi 0, %s139
      %s156 = sphi 0, %s140
      %s162 = sphi 0, %s164
      %s165 = sphi 0, %s162
      %s166 = sphi 0, %s165
      %s182 = sphi 0, %s166
    $region4: #{gqdl_forward.1} parent=1 // loop_header_branch
      %19 = sbr.rel (%p17) target = $region8
    $region5: #{gqdl_forward.1} parent=1 // loop_body
      %s21 = ssub.s32 %s16, 1
      %s22 = ssub.s32 %s16, 2
      %s23 = sadd.s32 %s16, 1
      %s24 = ssub.s32 %s16, %s23
      %p25 = scmp.eq.s32.totalorder %s24, 0
      %s27 = sadd.s32 %s26, 1
      %s28 = scalar_select %p25, %s26, %s27
      %p31 = pneg %p25
      %p32 = scmp.eq.s32.totalorder %s16, 1
      %p33 = por %p31, %p32
      %p34 = scmp.ne.s32.totalorder %s26, %s29
      %p35 = scmp.eq.s32.totalorder %s16, 0
      %p36 = por %p34, %p35
      %p37 = scmp.ne.s32.totalorder %s26, %s29
      %p38 = scmp.eq.s32.totalorder %s21, 1
      %p39 = por %p37, %p38
      %p40 = scmp.ne.s32.totalorder %s29, %s30
      %p41 = scmp.eq.s32.totalorder %s21, 0
      %p42 = por %p40, %p41
      %p43 = scmp.ne.s32.totalorder %s29, %s30
      %p44 = scmp.eq.s32.totalorder %s22, 1
      %p45 = por %p43, %p44
      %p47 = scmp.ne.s32.totalorder %s30, %s46
      %p48 = scmp.eq.s32.totalorder %s22, 0
      %p49 = por %p47, %p48
      %s51 = sadd.s32 %s50, 1
      %p54 = scmp.eq.s32.totalorder %s16, 1
      %p55 = scmp.ne.s32.totalorder %s50, %s52
      %p56 = scmp.eq.s32.totalorder %s16, 0
      %p57 = por %p55, %p56
      %p58 = scmp.ne.s32.totalorder %s50, %s52
      %p59 = scmp.eq.s32.totalorder %s21, 1
      %p60 = por %p58, %p59
      %p61 = scmp.ne.s32.totalorder %s52, %s53
      %p62 = scmp.eq.s32.totalorder %s21, 0
      %p63 = por %p61, %p62
      %p64 = scmp.ne.s32.totalorder %s52, %s53
      %p65 = scmp.eq.s32.totalorder %s22, 1
      %p66 = por %p64, %p65
      %p68 = scmp.ne.s32.totalorder %s53, %s67
      %p69 = scmp.eq.s32.totalorder %s22, 0
      %p70 = por %p68, %p69
      %s72 = sadd.s32 %s71, 1
      %p75 = scmp.eq.s32.totalorder %s16, 1
      %p76 = scmp.ne.s32.totalorder %s71, %s73
      %p77 = scmp.eq.s32.totalorder %s16, 0
      %p78 = por %p76, %p77
      %p79 = scmp.ne.s32.totalorder %s71, %s73
      %p80 = scmp.eq.s32.totalorder %s21, 1
      %p81 = por %p79, %p80
      %p82 = scmp.ne.s32.totalorder %s73, %s74
      %p83 = scmp.eq.s32.totalorder %s21, 0
      %p84 = por %p82, %p83
      %p85 = scmp.ne.s32.totalorder %s73, %s74
      %p86 = scmp.eq.s32.totalorder %s22, 1
      %p87 = por %p85, %p86
      %p89 = scmp.ne.s32.totalorder %s74, %s88
      %p90 = scmp.eq.s32.totalorder %s22, 0
      %p91 = por %p89, %p90
      %s93 = sadd.s32 %s92, 1
      %p96 = scmp.eq.s32.totalorder %s16, 1
      %p97 = scmp.ne.s32.totalorder %s92, %s94
      %p98 = scmp.eq.s32.totalorder %s16, 0
      %p99 = por %p97, %p98
      %p100 = scmp.ne.s32.totalorder %s92, %s94
      %p101 = scmp.eq.s32.totalorder %s21, 1
      %p102 = por %p100, %p101
      %p103 = scmp.ne.s32.totalorder %s94, %s95
      %p104 = scmp.eq.s32.totalorder %s21, 0
      %p105 = por %p103, %p104
      %p106 = scmp.ne.s32.totalorder %s94, %s95
      %p107 = scmp.eq.s32.totalorder %s22, 1
      %p108 = por %p106, %p107
      %p110 = scmp.ne.s32.totalorder %s95, %s109
      %p111 = scmp.eq.s32.totalorder %s22, 0
      %p112 = por %p110, %p111
      %s114 = sadd.s32 %s113, 1
      %p117 = scmp.eq.s32.totalorder %s16, 1
      %p118 = scmp.ne.s32.totalorder %s113, %s115
      %p119 = scmp.eq.s32.totalorder %s16, 0
      %p120 = por %p118, %p119
      %p121 = scmp.ne.s32.totalorder %s113, %s115
      %p122 = scmp.eq.s32.totalorder %s21, 1
      %p123 = por %p121, %p122
      %p124 = scmp.ne.s32.totalorder %s115, %s116
      %p125 = scmp.eq.s32.totalorder %s21, 0
      %p126 = por %p124, %p125
      %p127 = scmp.ne.s32.totalorder %s115, %s116
      %p128 = scmp.eq.s32.totalorder %s22, 1
      %p129 = por %p127, %p128
      %p131 = scmp.ne.s32.totalorder %s116, %s130
      %p132 = scmp.eq.s32.totalorder %s22, 0
      %p133 = por %p131, %p132
      %s134 = ssub.s32 %s16, %s23
      %p135 = scmp.eq.s32.totalorder %s134, 0
      %s137 = sadd.s32 %s136, 1
      %s138 = scalar_select %p135, %s136, %s137
      %p141 = pneg %p135
      %p142 = scmp.eq.s32.totalorder %s16, 1
      %p143 = por %p141, %p142
      %p144 = scmp.ne.s32.totalorder %s136, %s139
      %p145 = scmp.eq.s32.totalorder %s16, 0
      %p146 = por %p144, %p145
      %p147 = scmp.ne.s32.totalorder %s136, %s139
      %p148 = scmp.eq.s32.totalorder %s21, 1
      %p149 = por %p147, %p148
      %p150 = scmp.ne.s32.totalorder %s139, %s140
      %p151 = scmp.eq.s32.totalorder %s21, 0
      %p152 = por %p150, %p151
      %p153 = scmp.ne.s32.totalorder %s139, %s140
      %p154 = scmp.eq.s32.totalorder %s22, 1
      %p155 = por %p153, %p154
      %p157 = scmp.ne.s32.totalorder %s140, %s156
      %p158 = scmp.eq.s32.totalorder %s22, 0
      %p159 = por %p157, %p158
      %s160 = ssub.s32 %s16, %s23
      %p161 = scmp.eq.s32.totalorder %s160, 0
      %s163 = sadd.s32 %s162, 1
      %s164 = scalar_select %p161, %s162, %s163
      %p167 = pneg %p161
      %p168 = scmp.eq.s32.totalorder %s16, 1
      %p169 = por %p167, %p168
      %p170 = scmp.ne.s32.totalorder %s162, %s165
      %p171 = scmp.eq.s32.totalorder %s16, 0
      %p172 = por %p170, %p171
      %p173 = scmp.ne.s32.totalorder %s162, %s165
      %p174 = scmp.eq.s32.totalorder %s21, 1
      %p175 = por %p173, %p174
      %p176 = scmp.ne.s32.totalorder %s165, %s166
      %p177 = scmp.eq.s32.totalorder %s21, 0
      %p178 = por %p176, %p177
      %p179 = scmp.ne.s32.totalorder %s165, %s166
      %p180 = scmp.eq.s32.totalorder %s22, 1
      %p181 = por %p179, %p180
      %p183 = scmp.ne.s32.totalorder %s166, %s182
      %p184 = scmp.eq.s32.totalorder %s22, 0
      %p185 = por %p183, %p184
      %p186 = scmp.le.s32.totalorder 1, %s16
      %p187 = scmp.lt.s32.totalorder %s16, 3
      %p188 = pnand %p186, %p187
      %p189 = pneg %p188
      // Predicated region
      $region9: #{gqdl_forward.1} parent=5 // pred_check
        _
      $region10: #{gqdl_forward.1} parent=5 // pred_check_branch
        %191 = sbr.rel (%p188) target = $region12
      $region11: #{gqdl_forward.1} parent=5 // pred_region
        %s192 = ssub.s32 %s16, 1
        // Predicated region
        $region13: #{gqdl_forward.1} parent=11 // pred_check
          %p193 = pneg %p63
        $region14: #{gqdl_forward.1} parent=11 // pred_check_branch
          %195 = sbr.rel (%p193) target = $region16
        $region15: #{gqdl_forward.1} parent=11 // pred_region
          _
        $region16: #{gqdl_forward.1} parent=11 // pred_fallthru
          _
        // Predicated region
        $region17: #{gqdl_forward.1} parent=11 // pred_check
          %p196 = pneg %p84
        $region18: #{gqdl_forward.1} parent=11 // pred_check_branch
          %198 = sbr.rel (%p196) target = $region20
        $region19: #{gqdl_forward.1} parent=11 // pred_region
          _
        $region20: #{gqdl_forward.1} parent=11 // pred_fallthru
          _
        // Predicated region
        $region21: #{gqdl_forward.1} parent=11 // pred_check
          %p199 = pneg %p105
        $region22: #{gqdl_forward.1} parent=11 // pred_check_branch
          %201 = sbr.rel (%p199) target = $region24
        $region23: #{gqdl_forward.1} parent=11 // pred_region
          _
        $region24: #{gqdl_forward.1} parent=11 // pred_fallthru
          _
        // Predicated region
        $region25: #{gqdl_forward.1} parent=11 // pred_check
          %p202 = pneg %p126
        $region26: #{gqdl_forward.1} parent=11 // pred_check_branch
          %204 = sbr.rel (%p202) target = $region28
        $region27: #{gqdl_forward.1} parent=11 // pred_region
          _
        $region28: #{gqdl_forward.1} parent=11 // pred_fallthru
          _
      $region12: #{gqdl_forward.1} parent=5 // pred_fallthru
        _
      %p205 = scmp.lt.s32.totalorder %s16, 2
      // Predicated region
      $region29: #{gqdl_forward.1} parent=5 // pred_check
        %p206 = pneg %p205
      $region30: #{gqdl_forward.1} parent=5 // pred_check_branch
        %208 = sbr.rel (%p206) target = $region32
      $region31: #{gqdl_forward.1} parent=5 // pred_region
        // Predicated region
        $region33: #{gqdl_forward.1} parent=31 // pred_check
          %p209 = pneg %p36
        $region34: #{gqdl_forward.1} parent=31 // pred_check_branch
          %211 = sbr.rel (%p209) target = $region36
        $region35: #{gqdl_forward.1} parent=31 // pred_region
          %s212 = smul.u32 16, %s16
          %p213 = scmp.lt.s32.totalorder %s212, 31
          %s214 = scalar_select %p213, %s212, 31
          %s215 = smul.addr %s214, 4
          %s216 = scalar_lea.vmem %s0, %s215
          %s217 = smul.u32 16, %s16
        $region36: #{gqdl_forward.1} parent=31 // pred_fallthru
          _
      $region32: #{gqdl_forward.1} parent=5 // pred_fallthru
        _
      %p218 = scmp.le.s32.totalorder 1, %s16
      %p219 = scmp.lt.s32.totalorder %s16, 3
      %p220 = pnand %p218, %p219
      %p221 = pneg %p220
      // Predicated region
      $region37: #{gqdl_forward.1} parent=5 // pred_check
        _
      $region38: #{gqdl_forward.1} parent=5 // pred_check_branch
        %223 = sbr.rel (%p220) target = $region40
      $region39: #{gqdl_forward.1} parent=5 // pred_region
        %s224 = ssub.s32 %s16, 1
        %s225 = smul.u32 16, %s21
        %p226 = scmp.lt.s32.totalorder %s225, 31
        %s227 = scalar_select %p226, %s225, 31
        %s228 = smul.addr %s227, 4
        %s229 = scalar_lea.vmem %s0, %s228
        %p230 = pneg %p42
        %p231 = pneg %p39
        %p232 = pneg %p63
        %p233 = pneg %p60
        %p234 = pneg %p84
        %p235 = pneg %p81
        %p236 = pneg %p105
        %p237 = pneg %p102
        %p238 = pneg %p126
        %p239 = pneg %p123
        %p240 = pneg %p152
        %p241 = pneg %p149
        %s242 = sand.u32 %s139, 1
        %s243 = scalar_lea.sflag [#allocation3], %s242
        %s244 = sand.u32 %s139, 1
        %s245 = smul.addr %s244, 128
        %s246 = scalar_lea.vmem [#allocation2], %s245
        %p247 = pneg %p178
        %p248 = pneg %p175
        %s249 = smul.u32 16, %s21
        %p250 = scmp.lt.s32.totalorder %s249, 31
        %s251 = scalar_select %p250, %s249, 31
        %s252 = smul.addr %s251, 8
        %s253 = scalar_lea.vmem %s6, %s252
        %s254 = smul.u32 16, %s21
        %p255 = scmp.lt.s32.totalorder %s254, 31
        %s256 = scalar_select %p255, %s254, 31
        %s257 = smul.addr %s256, 4
        %s258 = scalar_lea.vmem %s0, %s257
        %s259 = smul.u32 16, %s21
        %s260 = smul.u32 16, %s21
        %s261 = smul.u32 16, %s21
        %p262 = scmp.lt.s32.totalorder %s261, 31
        %s263 = scalar_select %p262, %s261, 31
        %s264 = smul.addr %s263, 8
        %s265 = scalar_lea.vmem %s6, %s264
        %s266 = smul.u32 16, %s21
        %v268 = vld [vmem:[%s258] sm:$0xf]
        %v269 = vld [vmem:[%s258 + $0x4] sm:$0xf]
        %v270 = vld [vmem:[%s258 + $0x8] sm:$0xf]
        %v271 = vld [vmem:[%s258 + $0xc] sm:$0xf]
        %v272 = vld [vmem:[%s258 + $0x10] sm:$0xf]
        %v273 = vld [vmem:[%s258 + $0x14] sm:$0xf]
        %v274 = vld [vmem:[%s258 + $0x18] sm:$0xf]
        %v275 = vld [vmem:[%s258 + $0x1c] sm:$0xf]
        %v276 = vld [vmem:[%s258 + $0x20] sm:$0xf]
        %v277 = vld [vmem:[%s258 + $0x24] sm:$0xf]
        %v278 = vld [vmem:[%s258 + $0x28] sm:$0xf]
        %v279 = vld [vmem:[%s258 + $0x2c] sm:$0xf]
        %v280 = vld [vmem:[%s258 + $0x30] sm:$0xf]
        %v281 = vld [vmem:[%s258 + $0x34] sm:$0xf]
        %v282 = vld [vmem:[%s258 + $0x38] sm:$0xf]
        %v283 = vld [vmem:[%s258 + $0x3c] sm:$0xf]
        %v284 = vld [vmem:[%s1] sm:$0xf]
        %v285 = vld [vmem:[%s1 + $0x4] sm:$0xf]
        %v286 = vld [vmem:[%s1 + $0x8] sm:$0xf]
        %v287 = vld [vmem:[%s1 + $0xc] sm:$0xf]
        %v288 = vld [vmem:[%s1 + $0x10] sm:$0xf]
        %v289 = vld [vmem:[%s1 + $0x14] sm:$0xf]
        %v290 = vld [vmem:[%s1 + $0x18] sm:$0xf]
        %v291 = vld [vmem:[%s1 + $0x1c] sm:$0xf]
        %v292 = vld [vmem:[%s1 + $0x20] sm:$0xf]
        %v293 = vld [vmem:[%s1 + $0x24] sm:$0xf]
        %v294 = vld [vmem:[%s1 + $0x28] sm:$0xf]
        %v295 = vld [vmem:[%s1 + $0x2c] sm:$0xf]
        %v296 = vld [vmem:[%s1 + $0x30] sm:$0xf]
        %v297 = vld [vmem:[%s1 + $0x34] sm:$0xf]
        %v298 = vld [vmem:[%s1 + $0x38] sm:$0xf]
        %v299 = vld [vmem:[%s1 + $0x3c] sm:$0xf]
        %v300 = vld [vmem:[%s2] sm:$0x1]
        %v302 = vlaneseq
        %v303 = vshrl.u32 %v302, 7
        %v304 = vsub.s32 0, %v303
        %v305 = vrot.slane %v300, %v304
        %v323 = vunpack.c.l.b16 %v268
        %v324 = vunpack.c.l.b16 %v269
        %v325 = vunpack.c.l.b16 %v270
        %v326 = vunpack.c.l.b16 %v271
        %v327 = vunpack.c.l.b16 %v272
        %v328 = vunpack.c.l.b16 %v273
        %v329 = vunpack.c.l.b16 %v274
        %v330 = vunpack.c.l.b16 %v275
        %v331 = vunpack.c.l.b16 %v276
        %v332 = vunpack.c.l.b16 %v277
        %v333 = vunpack.c.l.b16 %v278
        %v334 = vunpack.c.l.b16 %v279
        %v335 = vunpack.c.l.b16 %v280
        %v336 = vunpack.c.l.b16 %v281
        %v337 = vunpack.c.l.b16 %v282
        %v338 = vunpack.c.l.b16 %v283
        %v339 = vpack.c.b16 %v324, %v323
        %v340 = vpack.c.b16 %v326, %v325
        %v341 = vpack.c.b16 %v328, %v327
        %v342 = vpack.c.b16 %v330, %v329
        %v343 = vpack.c.b16 %v332, %v331
        %v344 = vpack.c.b16 %v334, %v333
        %v345 = vpack.c.b16 %v336, %v335
        %v346 = vpack.c.b16 %v338, %v337
        %v371 = vunpack.c.l.b16 %v284
        %v372 = vunpack.c.l.b16 %v285
        %v373 = vunpack.c.l.b16 %v286
        %v374 = vunpack.c.l.b16 %v287
        %v375 = vunpack.c.l.b16 %v288
        %v376 = vunpack.c.l.b16 %v289
        %v377 = vunpack.c.l.b16 %v290
        %v378 = vunpack.c.l.b16 %v291
        %v379 = vunpack.c.l.b16 %v292
        %v380 = vunpack.c.l.b16 %v293
        %v381 = vunpack.c.l.b16 %v294
        %v382 = vunpack.c.l.b16 %v295
        %v383 = vunpack.c.l.b16 %v296
        %v384 = vunpack.c.l.b16 %v297
        %v385 = vunpack.c.l.b16 %v298
        %v386 = vunpack.c.l.b16 %v299
        %v387 = vpack.c.b16 %v372, %v371
        %v388 = vpack.c.b16 %v374, %v373
        %v389 = vpack.c.b16 %v376, %v375
        %v390 = vpack.c.b16 %v378, %v377
        %v391 = vpack.c.b16 %v380, %v379
        %v392 = vpack.c.b16 %v382, %v381
        %v393 = vpack.c.b16 %v384, %v383
        %v394 = vpack.c.b16 %v386, %v385
        %403 = vmatprep.subr.bf16.mxu0 0
        %404 = vmatpush1.bf16.msra.mxu0 %v387
        %405 = vmatprep.subr.bf16.mxu0 0
        %406 = vmatpush1.bf16.msra.mxu0 %v388
        %407 = vmatprep.subr.bf16.mxu0 0
        %408 = vmatpush1.bf16.msra.mxu0 %v389
        %409 = vmatprep.subr.bf16.mxu0 0
        %410 = vmatpush1.bf16.msra.mxu0 %v390
        %411 = vmatprep.subr.bf16.mxu0 0
        %412 = vmatpush1.bf16.msra.mxu0 %v391
        %413 = vmatprep.subr.bf16.mxu0 0
        %414 = vmatpush1.bf16.msra.mxu0 %v392
        %415 = vmatprep.subr.bf16.mxu0 0
        %416 = vmatpush1.bf16.msra.mxu0 %v393
        %417 = vmatprep.subr.bf16.mxu0 0
        %418 = vmatpush1.bf16.msra.mxu0 %v394
        %419 = vmatprep.subr.bf16.mxu0 0
        %420 = vmatpush1.bf16.msra.mxu0 0
        %421 = vmatprep.subr.bf16.mxu0 0
        %422 = vmatpush1.bf16.msra.mxu0 0
        %423 = vmatprep.subr.bf16.mxu0 0
        %424 = vmatpush1.bf16.msra.mxu0 0
        %425 = vmatprep.subr.bf16.mxu0 0
        %426 = vmatpush1.bf16.msra.mxu0 0
        %427 = vmatprep.subr.bf16.mxu0 0
        %428 = vmatpush1.bf16.msra.mxu0 0
        %429 = vmatprep.subr.bf16.mxu0 0
        %430 = vmatpush1.bf16.msra.mxu0 0
        %431 = vmatprep.subr.bf16.mxu0 0
        %432 = vmatpush1.bf16.msra.mxu0 0
        %433 = vmatprep.subr.bf16.mxu0 0
        %434 = vmatpush1.bf16.msra.mxu0 0
        %435 = vmatprep.mubr.bf16.mxu0 0
        %436 = vmatmul.mubr.bf16.gmra.mrb[0].mxu0 %v339
        %v437 = vpop.f32.mrb[0].mxu0
        %v438 = vadd.f32 %v305, %v437
        %v439 = vpop.f32.mrb[0].mxu0
        %v440 = vpop.f32.mrb[0].mxu0
        %v441 = vadd.f32 %v305, %v440
        %v442 = vpop.f32.mrb[0].mxu0
        %443 = vmatprep.mubr.bf16.mxu0 0
        %444 = vmatmul.mubr.bf16.gmra.mrb[0].mxu0 %v340
        %v445 = vpop.f32.mrb[0].mxu0
        %v446 = vadd.f32 %v305, %v445
        %v447 = vpop.f32.mrb[0].mxu0
        %v448 = vpop.f32.mrb[0].mxu0
        %v449 = vadd.f32 %v305, %v448
        %v450 = vpop.f32.mrb[0].mxu0
        %451 = vmatprep.mubr.bf16.mxu0 0
        %452 = vmatmul.mubr.bf16.gmra.mrb[0].mxu0 %v341
        %v453 = vpop.f32.mrb[0].mxu0
        %v454 = vadd.f32 %v305, %v453
        %v455 = vpop.f32.mrb[0].mxu0
        %v456 = vpop.f32.mrb[0].mxu0
        %v457 = vadd.f32 %v305, %v456
        %v458 = vpop.f32.mrb[0].mxu0
        %459 = vmatprep.mubr.bf16.mxu0 0
        %460 = vmatmul.mubr.bf16.gmra.mrb[0].mxu0 %v342
        %v461 = vpop.f32.mrb[0].mxu0
        %v462 = vadd.f32 %v305, %v461
        %v463 = vpop.f32.mrb[0].mxu0
        %v464 = vpop.f32.mrb[0].mxu0
        %v465 = vadd.f32 %v305, %v464
        %v466 = vpop.f32.mrb[0].mxu0
        %467 = vmatprep.mubr.bf16.mxu0 0
        %468 = vmatmul.mubr.bf16.gmra.mrb[0].mxu0 %v343
        %v469 = vpop.f32.mrb[0].mxu0
        %v470 = vadd.f32 %v305, %v469
        %v471 = vpop.f32.mrb[0].mxu0
        %v472 = vpop.f32.mrb[0].mxu0
        %v473 = vadd.f32 %v305, %v472
        %v474 = vpop.f32.mrb[0].mxu0
        %475 = vmatprep.mubr.bf16.mxu0 0
        %476 = vmatmul.mubr.bf16.gmra.mrb[0].mxu0 %v344
        %v477 = vpop.f32.mrb[0].mxu0
        %v478 = vadd.f32 %v305, %v477
        %v479 = vpop.f32.mrb[0].mxu0
        %v480 = vpop.f32.mrb[0].mxu0
        %v481 = vadd.f32 %v305, %v480
        %v482 = vpop.f32.mrb[0].mxu0
        %483 = vmatprep.mubr.bf16.mxu0 0
        %484 = vmatmul.mubr.bf16.gmra.mrb[0].mxu0 %v345
        %v485 = vpop.f32.mrb[0].mxu0
        %v486 = vadd.f32 %v305, %v485
        %v487 = vpop.f32.mrb[0].mxu0
        %v488 = vpop.f32.mrb[0].mxu0
        %v489 = vadd.f32 %v305, %v488
        %v490 = vpop.f32.mrb[0].mxu0
        %491 = vmatprep.mubr.bf16.mxu0 0
        %492 = vmatmul.mubr.bf16.gmra.mrb[0].mxu0 %v346
        %v493 = vpop.f32.mrb[0].mxu0
        %v494 = vadd.f32 %v305, %v493
        %v495 = vpop.f32.mrb[0].mxu0
        %v496 = vpop.f32.mrb[0].mxu0
        %v497 = vadd.f32 %v305, %v496
        %v498 = vpop.f32.mrb[0].mxu0
        %499 = vdwg.mxu0
        %v500 = vlaneseq
        %v501 = vand.u32 %v500, 127
        %vm502 = vcmp.lt.s32.totalorder %v501, 10
        %v503 = vsel %vm502, %v438, -inf
        %v504 = vsel %vm502, %v441, -inf
        %v505 = vsel %vm502, %v446, -inf
        %v506 = vsel %vm502, %v449, -inf
        %v507 = vsel %vm502, %v454, -inf
        %v508 = vsel %vm502, %v457, -inf
        %v509 = vsel %vm502, %v462, -inf
        %v510 = vsel %vm502, %v465, -inf
        %v511 = vsel %vm502, %v470, -inf
        %v512 = vsel %vm502, %v473, -inf
        %v513 = vsel %vm502, %v478, -inf
        %v514 = vsel %vm502, %v481, -inf
        %v515 = vsel %vm502, %v486, -inf
        %v516 = vsel %vm502, %v489, -inf
        %v517 = vsel %vm502, %v494, -inf
        %v518 = vsel %vm502, %v497, -inf
        %vm519 = vcmask 162816
        %v520 = vsel %vm519, %v503, -inf
        %521 = vmax.xlane.f32.xlu0 %v520
        %v522 = vpop.xlane.xlu0 %521
        %v523 = vsel %vm519, %v504, -inf
        %524 = vmax.xlane.f32.xlu0 %v523
        %v525 = vpop.xlane.xlu0 %524
        %v526 = vsel %vm519, %v505, -inf
        %527 = vmax.xlane.f32.xlu0 %v526
        %v528 = vpop.xlane.xlu0 %527
        %v529 = vsel %vm519, %v506, -inf
        %530 = vmax.xlane.f32.xlu0 %v529
        %v531 = vpop.xlane.xlu0 %530
        %v532 = vsel %vm519, %v507, -inf
        %533 = vmax.xlane.f32.xlu0 %v532
        %v534 = vpop.xlane.xlu0 %533
        %v535 = vsel %vm519, %v508, -inf
        %536 = vmax.xlane.f32.xlu0 %v535
        %v537 = vpop.xlane.xlu0 %536
        %v538 = vsel %vm519, %v509, -inf
        %539 = vmax.xlane.f32.xlu0 %v538
        %v540 = vpop.xlane.xlu0 %539
        %v541 = vsel %vm519, %v510, -inf
        %542 = vmax.xlane.f32.xlu0 %v541
        %v543 = vpop.xlane.xlu0 %542
        %v544 = vsel %vm519, %v511, -inf
        %545 = vmax.xlane.f32.xlu0 %v544
        %v546 = vpop.xlane.xlu0 %545
        %v547 = vsel %vm519, %v512, -inf
        %548 = vmax.xlane.f32.xlu0 %v547
        %v549 = vpop.xlane.xlu0 %548
        %v550 = vsel %vm519, %v513, -inf
        %551 = vmax.xlane.f32.xlu0 %v550
        %v552 = vpop.xlane.xlu0 %551
        %v553 = vsel %vm519, %v514, -inf
        %554 = vmax.xlane.f32.xlu0 %v553
        %v555 = vpop.xlane.xlu0 %554
        %v556 = vsel %vm519, %v515, -inf
        %557 = vmax.xlane.f32.xlu0 %v556
        %v558 = vpop.xlane.xlu0 %557
        %v559 = vsel %vm519, %v516, -inf
        %560 = vmax.xlane.f32.xlu0 %v559
        %v561 = vpop.xlane.xlu0 %560
        %v562 = vsel %vm519, %v517, -inf
        %563 = vmax.xlane.f32.xlu0 %v562
        %v564 = vpop.xlane.xlu0 %563
        %v565 = vsel %vm519, %v518, -inf
        %566 = vmax.xlane.f32.xlu0 %v565
        %v567 = vpop.xlane.xlu0 %566
        %v568 = vsel %vm502, -inf, %v438
        %v569 = vsel %vm502, -inf, %v441
        %v570 = vsel %vm502, -inf, %v446
        %v571 = vsel %vm502, -inf, %v449
        %v572 = vsel %vm502, -inf, %v454
        %v573 = vsel %vm502, -inf, %v457
        %v574 = vsel %vm502, -inf, %v462
        %v575 = vsel %vm502, -inf, %v465
        %v576 = vsel %vm502, -inf, %v470
        %v577 = vsel %vm502, -inf, %v473
        %v578 = vsel %vm502, -inf, %v478
        %v579 = vsel %vm502, -inf, %v481
        %v580 = vsel %vm502, -inf, %v486
        %v581 = vsel %vm502, -inf, %v489
        %v582 = vsel %vm502, -inf, %v494
        %v583 = vsel %vm502, -inf, %v497
        %v584 = vsel %vm519, %v568, -inf
        %585 = vmax.xlane.f32.xlu0 %v584
        %v586 = vpop.xlane.xlu0 %585
        %v587 = vsel %vm519, %v569, -inf
        %588 = vmax.xlane.f32.xlu0 %v587
        %v589 = vpop.xlane.xlu0 %588
        %v590 = vsel %vm519, %v570, -inf
        %591 = vmax.xlane.f32.xlu0 %v590
        %v592 = vpop.xlane.xlu0 %591
        %v593 = vsel %vm519, %v571, -inf
        %594 = vmax.xlane.f32.xlu0 %v593
        %v595 = vpop.xlane.xlu0 %594
        %v596 = vsel %vm519, %v572, -inf
        %597 = vmax.xlane.f32.xlu0 %v596
        %v598 = vpop.xlane.xlu0 %597
        %v599 = vsel %vm519, %v573, -inf
        %600 = vmax.xlane.f32.xlu0 %v599
        %v601 = vpop.xlane.xlu0 %600
        %v602 = vsel %vm519, %v574, -inf
        %603 = vmax.xlane.f32.xlu0 %v602
        %v604 = vpop.xlane.xlu0 %603
        %v605 = vsel %vm519, %v575, -inf
        %606 = vmax.xlane.f32.xlu0 %v605
        %v607 = vpop.xlane.xlu0 %606
        %v608 = vsel %vm519, %v576, -inf
        %609 = vmax.xlane.f32.xlu0 %v608
        %v610 = vpop.xlane.xlu0 %609
        %v611 = vsel %vm519, %v577, -inf
        %612 = vmax.xlane.f32.xlu0 %v611
        %v613 = vpop.xlane.xlu0 %612
        %v614 = vsel %vm519, %v578, -inf
        %615 = vmax.xlane.f32.xlu0 %v614
        %v616 = vpop.xlane.xlu0 %615
        %v617 = vsel %vm519, %v579, -inf
        %618 = vmax.xlane.f32.xlu0 %v617
        %v619 = vpop.xlane.xlu0 %618
        %v620 = vsel %vm519, %v580, -inf
        %621 = vmax.xlane.f32.xlu0 %v620
        %v622 = vpop.xlane.xlu0 %621
        %v623 = vsel %vm519, %v581, -inf
        %624 = vmax.xlane.f32.xlu0 %v623
        %v625 = vpop.xlane.xlu0 %624
        %v626 = vsel %vm519, %v582, -inf
        %627 = vmax.xlane.f32.xlu0 %v626
        %v628 = vpop.xlane.xlu0 %627
        %v629 = vsel %vm519, %v583, -inf
        %630 = vmax.xlane.f32.xlu0 %v629
        %v631 = vpop.xlane.xlu0 %630
        %v632 = vsel %vm502, %v522, %v586
        %v633 = vsel %vm502, %v525, %v589
        %v634 = vsel %vm502, %v528, %v592
        %v635 = vsel %vm502, %v531, %v595
        %v636 = vsel %vm502, %v534, %v598
        %v637 = vsel %vm502, %v537, %v601
        %v638 = vsel %vm502, %v540, %v604
        %v639 = vsel %vm502, %v543, %v607
        %v640 = vsel %vm502, %v546, %v610
        %v641 = vsel %vm502, %v549, %v613
        %v642 = vsel %vm502, %v552, %v616
        %v643 = vsel %vm502, %v555, %v619
        %v644 = vsel %vm502, %v558, %v622
        %v645 = vsel %vm502, %v561, %v625
        %v646 = vsel %vm502, %v564, %v628
        %v647 = vsel %vm502, %v567, %v631
        %v648 = vsub.f32 %v438, %v632
        %v649 = vsub.f32 %v441, %v633
        %v650 = vsub.f32 %v446, %v634
        %v651 = vsub.f32 %v449, %v635
        %v652 = vsub.f32 %v454, %v636
        %v653 = vsub.f32 %v457, %v637
        %v654 = vsub.f32 %v462, %v638
        %v655 = vsub.f32 %v465, %v639
        %v656 = vsub.f32 %v470, %v640
        %v657 = vsub.f32 %v473, %v641
        %v658 = vsub.f32 %v478, %v642
        %v659 = vsub.f32 %v481, %v643
        %v660 = vsub.f32 %v486, %v644
        %v661 = vsub.f32 %v489, %v645
        %v662 = vsub.f32 %v494, %v646
        %v663 = vsub.f32 %v497, %v647
        %v664 = vmul.f32 %v648, 1.442695
        %v665 = vpow.pop %v664
        %v666 = vmul.f32 %v649, 1.442695
        %v667 = vpow.pop %v666
        %v668 = vmul.f32 %v650, 1.442695
        %v669 = vpow.pop %v668
        %v670 = vmul.f32 %v651, 1.442695
        %v671 = vpow.pop %v670
        %v672 = vmul.f32 %v652, 1.442695
        %v673 = vpow.pop %v672
        %v674 = vmul.f32 %v653, 1.442695
        %v675 = vpow.pop %v674
        %v676 = vmul.f32 %v654, 1.442695
        %v677 = vpow.pop %v676
        %v678 = vmul.f32 %v655, 1.442695
        %v679 = vpow.pop %v678
        %v680 = vmul.f32 %v656, 1.442695
        %v681 = vpow.pop %v680
        %v682 = vmul.f32 %v657, 1.442695
        %v683 = vpow.pop %v682
        %v684 = vmul.f32 %v658, 1.442695
        %v685 = vpow.pop %v684
        %v686 = vmul.f32 %v659, 1.442695
        %v687 = vpow.pop %v686
        %v688 = vmul.f32 %v660, 1.442695
        %v689 = vpow.pop %v688
        %v690 = vmul.f32 %v661, 1.442695
        %v691 = vpow.pop %v690
        %v692 = vmul.f32 %v662, 1.442695
        %v693 = vpow.pop %v692
        %v694 = vmul.f32 %v663, 1.442695
        %v695 = vpow.pop %v694
        %v696 = vsel %vm502, %v665, 0.0
        %v697 = vsel %vm502, %v667, 0.0
        %v698 = vsel %vm502, %v669, 0.0
        %v699 = vsel %vm502, %v671, 0.0
        %v700 = vsel %vm502, %v673, 0.0
        %v701 = vsel %vm502, %v675, 0.0
        %v702 = vsel %vm502, %v677, 0.0
        %v703 = vsel %vm502, %v679, 0.0
        %v704 = vsel %vm502, %v681, 0.0
        %v705 = vsel %vm502, %v683, 0.0
        %v706 = vsel %vm502, %v685, 0.0
        %v707 = vsel %vm502, %v687, 0.0
        %v708 = vsel %vm502, %v689, 0.0
        %v709 = vsel %vm502, %v691, 0.0
        %v710 = vsel %vm502, %v693, 0.0
        %v711 = vsel %vm502, %v695, 0.0
        %v712 = vsel %vm519, %v696, 0.0
        %713 = vadd.xlane.f32.xlu0 %v712
        %v714 = vpop.xlane.xlu0 %713
        %v715 = vsel %vm519, %v697, 0.0
        %716 = vadd.xlane.f32.xlu0 %v715
        %v717 = vpop.xlane.xlu0 %716
        %v718 = vsel %vm519, %v698, 0.0
        %719 = vadd.xlane.f32.xlu0 %v718
        %v720 = vpop.xlane.xlu0 %719
        %v721 = vsel %vm519, %v699, 0.0
        %722 = vadd.xlane.f32.xlu0 %v721
        %v723 = vpop.xlane.xlu0 %722
        %v724 = vsel %vm519, %v700, 0.0
        %725 = vadd.xlane.f32.xlu0 %v724
        %v726 = vpop.xlane.xlu0 %725
        %v727 = vsel %vm519, %v701, 0.0
        %728 = vadd.xlane.f32.xlu0 %v727
        %v729 = vpop.xlane.xlu0 %728
        %v730 = vsel %vm519, %v702, 0.0
        %731 = vadd.xlane.f32.xlu0 %v730
        %v732 = vpop.xlane.xlu0 %731
        %v733 = vsel %vm519, %v703, 0.0
        %734 = vadd.xlane.f32.xlu0 %v733
        %v735 = vpop.xlane.xlu0 %734
        %v736 = vsel %vm519, %v704, 0.0
        %737 = vadd.xlane.f32.xlu0 %v736
        %v738 = vpop.xlane.xlu0 %737
        %v739 = vsel %vm519, %v705, 0.0
        %740 = vadd.xlane.f32.xlu0 %v739
        %v741 = vpop.xlane.xlu0 %740
        %v742 = vsel %vm519, %v706, 0.0
        %743 = vadd.xlane.f32.xlu0 %v742
        %v744 = vpop.xlane.xlu0 %743
        %v745 = vsel %vm519, %v707, 0.0
        %746 = vadd.xlane.f32.xlu0 %v745
        %v747 = vpop.xlane.xlu0 %746
        %v748 = vsel %vm519, %v708, 0.0
        %749 = vadd.xlane.f32.xlu0 %v748
        %v750 = vpop.xlane.xlu0 %749
        %v751 = vsel %vm519, %v709, 0.0
        %752 = vadd.xlane.f32.xlu0 %v751
        %v753 = vpop.xlane.xlu0 %752
        %v754 = vsel %vm519, %v710, 0.0
        %755 = vadd.xlane.f32.xlu0 %v754
        %v756 = vpop.xlane.xlu0 %755
        %v757 = vsel %vm519, %v711, 0.0
        %758 = vadd.xlane.f32.xlu0 %v757
        %v759 = vpop.xlane.xlu0 %758
        %v760 = vsel %vm502, 0.0, %v665
        %v761 = vsel %vm502, 0.0, %v667
        %v762 = vsel %vm502, 0.0, %v669
        %v763 = vsel %vm502, 0.0, %v671
        %v764 = vsel %vm502, 0.0, %v673
        %v765 = vsel %vm502, 0.0, %v675
        %v766 = vsel %vm502, 0.0, %v677
        %v767 = vsel %vm502, 0.0, %v679
        %v768 = vsel %vm502, 0.0, %v681
        %v769 = vsel %vm502, 0.0, %v683
        %v770 = vsel %vm502, 0.0, %v685
        %v771 = vsel %vm502, 0.0, %v687
        %v772 = vsel %vm502, 0.0, %v689
        %v773 = vsel %vm502, 0.0, %v691
        %v774 = vsel %vm502, 0.0, %v693
        %v775 = vsel %vm502, 0.0, %v695
        %v776 = vsel %vm519, %v760, 0.0
        %777 = vadd.xlane.f32.xlu0 %v776
        %v778 = vpop.xlane.xlu0 %777
        %v779 = vsel %vm519, %v761, 0.0
        %780 = vadd.xlane.f32.xlu0 %v779
        %v781 = vpop.xlane.xlu0 %780
        %v782 = vsel %vm519, %v762, 0.0
        %783 = vadd.xlane.f32.xlu0 %v782
        %v784 = vpop.xlane.xlu0 %783
        %v785 = vsel %vm519, %v763, 0.0
        %786 = vadd.xlane.f32.xlu0 %v785
        %v787 = vpop.xlane.xlu0 %786
        %v788 = vsel %vm519, %v764, 0.0
        %789 = vadd.xlane.f32.xlu0 %v788
        %v790 = vpop.xlane.xlu0 %789
        %v791 = vsel %vm519, %v765, 0.0
        %792 = vadd.xlane.f32.xlu0 %v791
        %v793 = vpop.xlane.xlu0 %792
        %v794 = vsel %vm519, %v766, 0.0
        %795 = vadd.xlane.f32.xlu0 %v794
        %v796 = vpop.xlane.xlu0 %795
        %v797 = vsel %vm519, %v767, 0.0
        %798 = vadd.xlane.f32.xlu0 %v797
        %v799 = vpop.xlane.xlu0 %798
        %v800 = vsel %vm519, %v768, 0.0
        %801 = vadd.xlane.f32.xlu0 %v800
        %v802 = vpop.xlane.xlu0 %801
        %v803 = vsel %vm519, %v769, 0.0
        %804 = vadd.xlane.f32.xlu0 %v803
        %v805 = vpop.xlane.xlu0 %804
        %v806 = vsel %vm519, %v770, 0.0
        %807 = vadd.xlane.f32.xlu0 %v806
        %v808 = vpop.xlane.xlu0 %807
        %v809 = vsel %vm519, %v771, 0.0
        %810 = vadd.xlane.f32.xlu0 %v809
        %v811 = vpop.xlane.xlu0 %810
        %v812 = vsel %vm519, %v772, 0.0
        %813 = vadd.xlane.f32.xlu0 %v812
        %v814 = vpop.xlane.xlu0 %813
        %v815 = vsel %vm519, %v773, 0.0
        %816 = vadd.xlane.f32.xlu0 %v815
        %v817 = vpop.xlane.xlu0 %816
        %v818 = vsel %vm519, %v774, 0.0
        %819 = vadd.xlane.f32.xlu0 %v818
        %v820 = vpop.xlane.xlu0 %819
        %v821 = vsel %vm519, %v775, 0.0
        %822 = vadd.xlane.f32.xlu0 %v821
        %v823 = vpop.xlane.xlu0 %822
        %v824 = vrcp.pop %v714
        %v825 = vrcp.pop %v717
        %v826 = vrcp.pop %v720
        %v827 = vrcp.pop %v723
        %v828 = vrcp.pop %v726
        %v829 = vrcp.pop %v729
        %v830 = vrcp.pop %v732
        %v831 = vrcp.pop %v735
        %v832 = vrcp.pop %v738
        %v833 = vrcp.pop %v741
        %v834 = vrcp.pop %v744
        %v835 = vrcp.pop %v747
        %v836 = vrcp.pop %v750
        %v837 = vrcp.pop %v753
        %v838 = vrcp.pop %v756
        %v839 = vrcp.pop %v759
        %v840 = vrcp.pop %v778
        %v841 = vrcp.pop %v781
        %v842 = vrcp.pop %v784
        %v843 = vrcp.pop %v787
        %v844 = vrcp.pop %v790
        %v845 = vrcp.pop %v793
        %v846 = vrcp.pop %v796
        %v847 = vrcp.pop %v799
        %v848 = vrcp.pop %v802
        %v849 = vrcp.pop %v805
        %v850 = vrcp.pop %v808
        %v851 = vrcp.pop %v811
        %v852 = vrcp.pop %v814
        %v853 = vrcp.pop %v817
        %v854 = vrcp.pop %v820
        %v855 = vrcp.pop %v823
        %v856 = vsel %vm502, %v824, %v840
        %v857 = vsel %vm502, %v825, %v841
        %v858 = vsel %vm502, %v826, %v842
        %v859 = vsel %vm502, %v827, %v843
        %v860 = vsel %vm502, %v828, %v844
        %v861 = vsel %vm502, %v829, %v845
        %v862 = vsel %vm502, %v830, %v846
        %v863 = vsel %vm502, %v831, %v847
        %v864 = vsel %vm502, %v832, %v848
        %v865 = vsel %vm502, %v833, %v849
        %v866 = vsel %vm502, %v834, %v850
        %v867 = vsel %vm502, %v835, %v851
        %v868 = vsel %vm502, %v836, %v852
        %v869 = vsel %vm502, %v837, %v853
        %v870 = vsel %vm502, %v838, %v854
        %v871 = vsel %vm502, %v839, %v855
        %v872 = vmul.f32 %v665, %v856
        %v873 = vmul.f32 %v667, %v857
        %v874 = vmul.f32 %v669, %v858
        %v875 = vmul.f32 %v671, %v859
        %v876 = vmul.f32 %v673, %v860
        %v877 = vmul.f32 %v675, %v861
        %v878 = vmul.f32 %v677, %v862
        %v879 = vmul.f32 %v679, %v863
        %v880 = vmul.f32 %v681, %v864
        %v881 = vmul.f32 %v683, %v865
        %v882 = vmul.f32 %v685, %v866
        %v883 = vmul.f32 %v687, %v867
        %v884 = vmul.f32 %v689, %v868
        %v885 = vmul.f32 %v691, %v869
        %v886 = vmul.f32 %v693, %v870
        %v887 = vmul.f32 %v695, %v871
        %v888 = vpack.c.bf16 %v873, %v872
        %v889 = vpack.c.bf16 %v875, %v874
        %v890 = vpack.c.bf16 %v877, %v876
        %v891 = vpack.c.bf16 %v879, %v878
        %v892 = vpack.c.bf16 %v881, %v880
        %v893 = vpack.c.bf16 %v883, %v882
        %v894 = vpack.c.bf16 %v885, %v884
        %v895 = vpack.c.bf16 %v887, %v886
        %v896 = vld [vmem:[%s3] sm:$0xf]
        %v897 = vld [vmem:[%s3 + $0x4] sm:$0xf]
        %v898 = vld [vmem:[%s3 + $0x8] sm:$0x3]
        %v899 = vld [vmem:[%s4] sm:$0x1]
        %v901 = vlaneseq
        %v902 = vshrl.u32 %v901, 7
        %v903 = vsub.s32 0, %v902
        %v904 = vrot.slane %v899, %v903
        %v909 = vunpack.c.l.b16 %v896
        %v910 = vunpack.c.l.b16 %v897
        %v911 = vunpack.c.l.b16 %v898
        %v912 = vpack.c.b16 %v910, %v909
        %v913 = vpack.c.b16 %v911, %v911
        %v916 = vsel %vm519, %v888, 0
        %v919 = vsel %vm519, %v889, 0
        %v922 = vsel %vm519, %v890, 0
        %v925 = vsel %vm519, %v891, 0
        %v928 = vsel %vm519, %v892, 0
        %v931 = vsel %vm519, %v893, 0
        %v934 = vsel %vm519, %v894, 0
        %v937 = vsel %vm519, %v895, 0
        %vm939 = vcmask 1041408
        %v941 = vsel %vm939, %v913, 0
        %943 = vmatprep.subr.bf16.mxu0 0
        %944 = vmatpush1.bf16.msra.mxu0 %v912
        %945 = vmatprep.subr.bf16.mxu0 0
        %946 = vmatpush1.bf16.msra.mxu0 %v941
        %947 = vmatprep.subr.bf16.mxu0 0
        %948 = vmatpush1.bf16.msra.mxu0 0
        %949 = vmatprep.subr.bf16.mxu0 0
        %950 = vmatpush1.bf16.msra.mxu0 0
        %951 = vmatprep.subr.bf16.mxu0 0
        %952 = vmatpush1.bf16.msra.mxu0 0
        %953 = vmatprep.subr.bf16.mxu0 0
        %954 = vmatpush1.bf16.msra.mxu0 0
        %955 = vmatprep.subr.bf16.mxu0 0
        %956 = vmatpush1.bf16.msra.mxu0 0
        %957 = vmatprep.subr.bf16.mxu0 0
        %958 = vmatpush1.bf16.msra.mxu0 0
        %959 = vmatprep.subr.bf16.mxu0 0
        %960 = vmatpush1.bf16.msra.mxu0 0
        %961 = vmatprep.subr.bf16.mxu0 0
        %962 = vmatpush1.bf16.msra.mxu0 0
        %963 = vmatprep.subr.bf16.mxu0 0
        %964 = vmatpush1.bf16.msra.mxu0 0
        %965 = vmatprep.subr.bf16.mxu0 0
        %966 = vmatpush1.bf16.msra.mxu0 0
        %967 = vmatprep.subr.bf16.mxu0 0
        %968 = vmatpush1.bf16.msra.mxu0 0
        %969 = vmatprep.subr.bf16.mxu0 0
        %970 = vmatpush1.bf16.msra.mxu0 0
        %971 = vmatprep.subr.bf16.mxu0 0
        %972 = vmatpush1.bf16.msra.mxu0 0
        %973 = vmatprep.subr.bf16.mxu0 0
        %974 = vmatpush1.bf16.msra.mxu0 0
        %975 = vmatprep.mubr.bf16.mxu0 0
        %976 = vmatmul.mubr.bf16.gmra.mrb[0].mxu0 %v916
        %v977 = vpop.f32.mrb[0].mxu0
        %v978 = vadd.f32 %v904, %v977
        %v979 = vpop.f32.mrb[0].mxu0
        %v980 = vpop.f32.mrb[0].mxu0
        %v981 = vadd.f32 %v904, %v980
        %v982 = vpop.f32.mrb[0].mxu0
        %983 = vmatprep.mubr.bf16.mxu0 0
        %984 = vmatmul.mubr.bf16.gmra.mrb[0].mxu0 %v919
        %v985 = vpop.f32.mrb[0].mxu0
        %v986 = vadd.f32 %v904, %v985
        %v987 = vpop.f32.mrb[0].mxu0
        %v988 = vpop.f32.mrb[0].mxu0
        %v989 = vadd.f32 %v904, %v988
        %v990 = vpop.f32.mrb[0].mxu0
        %991 = vmatprep.mubr.bf16.mxu0 0
        %992 = vmatmul.mubr.bf16.gmra.mrb[0].mxu0 %v922
        %v993 = vpop.f32.mrb[0].mxu0
        %v994 = vadd.f32 %v904, %v993
        %v995 = vpop.f32.mrb[0].mxu0
        %v996 = vpop.f32.mrb[0].mxu0
        %v997 = vadd.f32 %v904, %v996
        %v998 = vpop.f32.mrb[0].mxu0
        %999 = vmatprep.mubr.bf16.mxu0 0
        %1000 = vmatmul.mubr.bf16.gmra.mrb[0].mxu0 %v925
        %v1001 = vpop.f32.mrb[0].mxu0
        %v1002 = vadd.f32 %v904, %v1001
        %v1003 = vpop.f32.mrb[0].mxu0
        %v1004 = vpop.f32.mrb[0].mxu0
        %v1005 = vadd.f32 %v904, %v1004
        %v1006 = vpop.f32.mrb[0].mxu0
        %1007 = vmatprep.mubr.bf16.mxu0 0
        %1008 = vmatmul.mubr.bf16.gmra.mrb[0].mxu0 %v928
        %v1009 = vpop.f32.mrb[0].mxu0
        %v1010 = vadd.f32 %v904, %v1009
        %v1011 = vpop.f32.mrb[0].mxu0
        %v1012 = vpop.f32.mrb[0].mxu0
        %v1013 = vadd.f32 %v904, %v1012
        %v1014 = vpop.f32.mrb[0].mxu0
        %1015 = vmatprep.mubr.bf16.mxu0 0
        %1016 = vmatmul.mubr.bf16.gmra.mrb[0].mxu0 %v931
        %v1017 = vpop.f32.mrb[0].mxu0
        %v1018 = vadd.f32 %v904, %v1017
        %v1019 = vpop.f32.mrb[0].mxu0
        %v1020 = vpop.f32.mrb[0].mxu0
        %v1021 = vadd.f32 %v904, %v1020
        %v1022 = vpop.f32.mrb[0].mxu0
        %1023 = vmatprep.mubr.bf16.mxu0 0
        %1024 = vmatmul.mubr.bf16.gmra.mrb[0].mxu0 %v934
        %v1025 = vpop.f32.mrb[0].mxu0
        %v1026 = vadd.f32 %v904, %v1025
        %v1027 = vpop.f32.mrb[0].mxu0
        %v1028 = vpop.f32.mrb[0].mxu0
        %v1029 = vadd.f32 %v904, %v1028
        %v1030 = vpop.f32.mrb[0].mxu0
        %1031 = vmatprep.mubr.bf16.mxu0 0
        %1032 = vmatmul.mubr.bf16.gmra.mrb[0].mxu0 %v937
        %v1033 = vpop.f32.mrb[0].mxu0
        %v1034 = vadd.f32 %v904, %v1033
        %v1035 = vpop.f32.mrb[0].mxu0
        %v1036 = vpop.f32.mrb[0].mxu0
        %v1037 = vadd.f32 %v904, %v1036
        %v1038 = vpop.f32.mrb[0].mxu0
        %1039 = vdwg.mxu0
        %1040 = vst [vmem:[%s246] sm:$0xff] %v978
        %1041 = vst [vmem:[%s246 + $0x8] sm:$0xff] %v981
        %1042 = vst [vmem:[%s246 + $0x10] sm:$0xff] %v986
        %1043 = vst [vmem:[%s246 + $0x18] sm:$0xff] %v989
        %1044 = vst [vmem:[%s246 + $0x20] sm:$0xff] %v994
        %1045 = vst [vmem:[%s246 + $0x28] sm:$0xff] %v997
        %1046 = vst [vmem:[%s246 + $0x30] sm:$0xff] %v1002
        %1047 = vst [vmem:[%s246 + $0x38] sm:$0xff] %v1005
        %1048 = vst [vmem:[%s246 + $0x40] sm:$0xff] %v1010
        %1049 = vst [vmem:[%s246 + $0x48] sm:$0xff] %v1013
        %1050 = vst [vmem:[%s246 + $0x50] sm:$0xff] %v1018
        %1051 = vst [vmem:[%s246 + $0x58] sm:$0xff] %v1021
        %1052 = vst [vmem:[%s246 + $0x60] sm:$0xff] %v1026
        %1053 = vst [vmem:[%s246 + $0x68] sm:$0xff] %v1029
        %1054 = vst [vmem:[%s246 + $0x70] sm:$0xff] %v1034
        %1055 = vst [vmem:[%s246 + $0x78] sm:$0xff] %v1037
        %1072 = vrot.lane.b32.xlu0 %v872, 118
        %v1073 = vpop.permute.xlu0 %1072
        %1074 = vrot.lane.b32.xlu0 %v873, 118
        %v1075 = vpop.permute.xlu0 %1074
        %1076 = vrot.lane.b32.xlu0 %v874, 118
        %v1077 = vpop.permute.xlu0 %1076
        %1078 = vrot.lane.b32.xlu0 %v875, 118
        %v1079 = vpop.permute.xlu0 %1078
        %1080 = vrot.lane.b32.xlu0 %v876, 118
        %v1081 = vpop.permute.xlu0 %1080
        %1082 = vrot.lane.b32.xlu0 %v877, 118
        %v1083 = vpop.permute.xlu0 %1082
        %1084 = vrot.lane.b32.xlu0 %v878, 118
        %v1085 = vpop.permute.xlu0 %1084
        %1086 = vrot.lane.b32.xlu0 %v879, 118
        %v1087 = vpop.permute.xlu0 %1086
        %1088 = vrot.lane.b32.xlu0 %v880, 118
        %v1089 = vpop.permute.xlu0 %1088
        %1090 = vrot.lane.b32.xlu0 %v881, 118
        %v1091 = vpop.permute.xlu0 %1090
        %1092 = vrot.lane.b32.xlu0 %v882, 118
        %v1093 = vpop.permute.xlu0 %1092
        %1094 = vrot.lane.b32.xlu0 %v883, 118
        %v1095 = vpop.permute.xlu0 %1094
        %1096 = vrot.lane.b32.xlu0 %v884, 118
        %v1097 = vpop.permute.xlu0 %1096
        %1098 = vrot.lane.b32.xlu0 %v885, 118
        %v1099 = vpop.permute.xlu0 %1098
        %1100 = vrot.lane.b32.xlu0 %v886, 118
        %v1101 = vpop.permute.xlu0 %1100
        %1102 = vrot.lane.b32.xlu0 %v887, 118
        %v1103 = vpop.permute.xlu0 %1102
        %v1120 = vadd.f32 %v872, %v1073
        %v1121 = vadd.f32 %v873, %v1075
        %v1122 = vadd.f32 %v874, %v1077
        %v1123 = vadd.f32 %v875, %v1079
        %v1124 = vadd.f32 %v876, %v1081
        %v1125 = vadd.f32 %v877, %v1083
        %v1126 = vadd.f32 %v878, %v1085
        %v1127 = vadd.f32 %v879, %v1087
        %v1128 = vadd.f32 %v880, %v1089
        %v1129 = vadd.f32 %v881, %v1091
        %v1130 = vadd.f32 %v882, %v1093
        %v1131 = vadd.f32 %v883, %v1095
        %v1132 = vadd.f32 %v884, %v1097
        %v1133 = vadd.f32 %v885, %v1099
        %v1134 = vadd.f32 %v886, %v1101
        %v1135 = vadd.f32 %v887, %v1103
        %v1136 = vmul.f32 %v1120, 0.5
        %v1137 = vmul.f32 %v1121, 0.5
        %v1138 = vmul.f32 %v1122, 0.5
        %v1139 = vmul.f32 %v1123, 0.5
        %v1140 = vmul.f32 %v1124, 0.5
        %v1141 = vmul.f32 %v1125, 0.5
        %v1142 = vmul.f32 %v1126, 0.5
        %v1143 = vmul.f32 %v1127, 0.5
        %v1144 = vmul.f32 %v1128, 0.5
        %v1145 = vmul.f32 %v1129, 0.5
        %v1146 = vmul.f32 %v1130, 0.5
        %v1147 = vmul.f32 %v1131, 0.5
        %v1148 = vmul.f32 %v1132, 0.5
        %v1149 = vmul.f32 %v1133, 0.5
        %v1150 = vmul.f32 %v1134, 0.5
        %v1151 = vmul.f32 %v1135, 0.5
        %vm1152 = vcmask 80896
        %1153 = vst.msk [vmem:[%s265] sm:$0xff] %vm1152, %v1136
        %1154 = vst.msk [vmem:[%s265 + $0x8] sm:$0xff] %vm1152, %v1137
        %1155 = vst.msk [vmem:[%s265 + $0x10] sm:$0xff] %vm1152, %v1138
        %1156 = vst.msk [vmem:[%s265 + $0x18] sm:$0xff] %vm1152, %v1139
        %1157 = vst.msk [vmem:[%s265 + $0x20] sm:$0xff] %vm1152, %v1140
        %1158 = vst.msk [vmem:[%s265 + $0x28] sm:$0xff] %vm1152, %v1141
        %1159 = vst.msk [vmem:[%s265 + $0x30] sm:$0xff] %vm1152, %v1142
        %1160 = vst.msk [vmem:[%s265 + $0x38] sm:$0xff] %vm1152, %v1143
        %1161 = vst.msk [vmem:[%s265 + $0x40] sm:$0xff] %vm1152, %v1144
        %1162 = vst.msk [vmem:[%s265 + $0x48] sm:$0xff] %vm1152, %v1145
        %1163 = vst.msk [vmem:[%s265 + $0x50] sm:$0xff] %vm1152, %v1146
        %1164 = vst.msk [vmem:[%s265 + $0x58] sm:$0xff] %vm1152, %v1147
        %1165 = vst.msk [vmem:[%s265 + $0x60] sm:$0xff] %vm1152, %v1148
        %1166 = vst.msk [vmem:[%s265 + $0x68] sm:$0xff] %vm1152, %v1149
        %1167 = vst.msk [vmem:[%s265 + $0x70] sm:$0xff] %vm1152, %v1150
        %1168 = vst.msk [vmem:[%s265 + $0x78] sm:$0xff] %vm1152, %v1151
        %s1169 = sand.u32 %s139, 1
        %s1170 = scalar_lea.sflag [#allocation3], %s1169
        %s1171 = sand.u32 %s139, 1
        %s1172 = smul.addr %s1171, 128
        %s1173 = scalar_lea.vmem [#allocation2], %s1172
        %s1174 = smul.u32 16, %s21
        %p1175 = scmp.lt.s32.totalorder %s1174, 31
        %s1176 = scalar_select %p1175, %s1174, 31
        %s1177 = smul.addr %s1176, 8
        %s1178 = scalar_lea.vmem %s6, %s1177
        // Predicated region
        $region41: #{gqdl_forward.1} parent=39 // pred_check
          %p1179 = pneg %p149
        $region42: #{gqdl_forward.1} parent=39 // pred_check_branch
          %1181 = sbr.rel (%p1179) target = $region44
        $region43: #{gqdl_forward.1} parent=39 // pred_region
          %s1182 = smul.u32 16, %s21
          %s1184 = ssub.s32 2048, 2048
          %1185 = vsyncadd %s1170, %s1184
          %s1186 = smul.addr %s1182, 128
          %s1187 = scalar_lea.hbm %s5, %s1186
          %s1188 = sshll.u32 %s1173, 4
          %s1189 = int_to_ptr.vmem [resolvable:$true] %s1188
          %1194 = dma.vmem_to_hbm [thread:$0]  %s1189, 2048, %s1187, %s1170, 128, 128, 8
        $region44: #{gqdl_forward.1} parent=39 // pred_fallthru
          _
        // Predicated region
        $region45: #{gqdl_forward.1} parent=39 // pred_check
          %p1195 = pneg %p175
        $region46: #{gqdl_forward.1} parent=39 // pred_check_branch
          %1197 = sbr.rel (%p1195) target = $region48
        $region47: #{gqdl_forward.1} parent=39 // pred_region
          %s1198 = smul.u32 16, %s21
        $region48: #{gqdl_forward.1} parent=39 // pred_fallthru
          _
      $region40: #{gqdl_forward.1} parent=5 // pred_fallthru
        _
      %p1199 = scmp.le.s32.totalorder 2, %s16
      // Predicated region
      $region49: #{gqdl_forward.1} parent=5 // pred_check
        %p1200 = pneg %p1199
      $region50: #{gqdl_forward.1} parent=5 // pred_check_branch
        %1202 = sbr.rel (%p1200) target = $region52
      $region51: #{gqdl_forward.1} parent=5 // pred_region
        %s1203 = ssub.s32 %s16, 2
        // Predicated region
        $region53: #{gqdl_forward.1} parent=51 // pred_check
          %p1204 = pneg %p155
        $region54: #{gqdl_forward.1} parent=51 // pred_check_branch
          %1206 = sbr.rel (%p1204) target = $region56
        $region55: #{gqdl_forward.1} parent=51 // pred_region
          %s1207 = sand.u32 %s140, 1
          %s1208 = scalar_lea.sflag [#allocation3], %s1207
          %s1209 = sand.u32 %s140, 1
          %s1210 = smul.addr %s1209, 128
          %s1211 = scalar_lea.vmem [#allocation2], %s1210
          %1212 = dma.done %s1208, 2048
        $region56: #{gqdl_forward.1} parent=51 // pred_fallthru
          _
        // Predicated region
        $region57: #{gqdl_forward.1} parent=51 // pred_check
          %p1213 = pneg %p181
        $region58: #{gqdl_forward.1} parent=51 // pred_check_branch
          %1215 = sbr.rel (%p1213) target = $region60
        $region59: #{gqdl_forward.1} parent=51 // pred_region
          %s1216 = smul.u32 16, %s22
          %p1217 = scmp.lt.s32.totalorder %s1216, 31
          %s1218 = scalar_select %p1217, %s1216, 31
          %s1219 = smul.addr %s1218, 8
          %s1220 = scalar_lea.vmem %s6, %s1219
        $region60: #{gqdl_forward.1} parent=51 // pred_fallthru
          _
      $region52: #{gqdl_forward.1} parent=5 // pred_fallthru
        _
    $region6: #{gqdl_forward.1} parent=1 // loop_footer
      %s20 = sadd.s32 1, %s16
    $region7: #{gqdl_forward.1} parent=1 // loop_footer_branch
      %15 = sbr.rel target = $region3
    $region8: #{gqdl_forward.1} parent=1 // loop_exit
      _
    %1221 = vsyncpa [#allocation3], 1
    %s1222 = scalar_lea.sflag [#allocation3], 1
    %1223 = vsyncpa %s1222, 1

</llo_original>
